<compile_context>
chip_gen: v7x
topology: tpu7x:2x2x1
jax: 0.10.0
libtpu: 0.0.40
codegen_flags: <defaults>
</compile_context>

<pallas_src>
import functools

import jax
import jax.numpy as jnp
from jax.experimental import pallas as pl
from jax.experimental.pallas import tpu as pltpu

_LANES = 128
_SUBLANES = 8


def _round_up(x, m):
    return ((x + m - 1) // m) * m


def _tensorcores_per_device():
    """v7x (and v4/v5p megacore) expose 2 TensorCores per device; v5e/v6e have 1."""
    try:
        kind = jax.devices()[0].device_kind.lower()
    except Exception:
        return 1
    return 2 if any(t in kind for t in ("v7", "7x", "v4", "v5p")) else 1


def mha_kernel(q_ref, kv_ref,          # (bb*Sq, q_in+1) f32, (bb*Sk, k_in+v_in+1) f32
               wq_ref, wkv_ref,        # (q_in+1, H*Dkp) bf16, (k_in+v_in+1, H*Dkp+H*Dvp) bf16
               o_ref,                  # (bb*H*Sq, Dvp) f32
               *, n_heads, dk_pad, dv_pad, bb, sq, sk):
    hk = n_heads * dk_pad

    # Fused projections on the MXU (bf16 in, f32 accumulate).  Biases ride as
    # the last weight row against the constant-1 activation column; the K
    # projection is already pre-divided by inv_scale_factor host-side.
    q_all = jnp.dot(q_ref[...].astype(jnp.bfloat16), wq_ref[...],
                    preferred_element_type=jnp.float32)            # (bb*Sq, H*Dkp)
    kv_all = jnp.dot(kv_ref[...].astype(jnp.bfloat16), wkv_ref[...],
                     preferred_element_type=jnp.float32)           # (bb*Sk, H*Dkp+H*Dvp)

    for b in range(bb):  # static unroll; bb is 1 (v7x) or B (v5e/v6e, B small)
        qb = q_all[b * sq:(b + 1) * sq]                            # (Sq, H*Dkp)
        kb = kv_all[b * sk:(b + 1) * sk, :hk]                      # (Sk, H*Dkp)
        vb = kv_all[b * sk:(b + 1) * sk, hk:]                      # (Sk, H*Dvp)

        # _split_heads: heads stacked along the sublane (sequence) axis.  The
        # per-head column slices are 128-lane aligned -> no XLU lane shifts.
        qh = jnp.concatenate(
            [qb[:, h * dk_pad:(h + 1) * dk_pad] for h in range(n_heads)], axis=0)
        kh = jnp.concatenate(
            [kb[:, h * dk_pad:(h + 1) * dk_pad] for h in range(n_heads)], axis=0)
        vh = jnp.concatenate(
            [vb[:, h * dv_pad:(h + 1) * dv_pad] for h in range(n_heads)], axis=0)

        # scores = q @ (k / inv_scale)^T.  dot_general with RHS contracting
        # dim 1 is the MXU-native transposed-RHS form (no explicit transpose).
        scores = jax.lax.dot_general(
            qh.astype(jnp.bfloat16), kh.astype(jnp.bfloat16),
            (((1,), (1,)), ((), ())),
            preferred_element_type=jnp.float32)                    # (H*Sq, H*Sk)

        # softmax(dim=-1) with deferred normalization.
        m = jnp.max(scores, axis=-1, keepdims=True)
        e = jnp.exp(scores - m)
        denom = jnp.sum(e, axis=-1, keepdims=True)

        # TODO(synk): torch.nn.Dropout(p=0.5) in training mode is stochastic;
        # implemented as identity (eval-mode semantics).

        out = jnp.dot(e.astype(jnp.bfloat16), vh.astype(jnp.bfloat16),
                      preferred_element_type=jnp.float32)          # (H*Sq, Dvp)
        rows = n_heads * sq
        # Normalize the small (H*Sq, Dvp) result, not the (H*Sq, H*Sk) matrix.
        o_ref[b * rows:(b + 1) * rows, :] = out * pl.reciprocal(denom, approx=False)


def _pad_heads(w, b, n_heads, d_head, d_pad, scale=1.0):
    """PyTorch Linear params (out=H*d_head, in_f), bias (H*d_head,) -> transposed
    weight (in_f, H*d_pad) and bias row (H*d_pad,), per-head zero-padded to a
    128-lane boundary, optionally pre-divided by `scale`."""
    out_f, in_f = w.shape
    assert out_f == n_heads * d_head
    w3 = (w / scale).reshape(n_heads, d_head, in_f)
    w3 = jnp.pad(w3, ((0, 0), (0, d_pad - d_head), (0, 0)))
    w_t = w3.reshape(n_heads * d_pad, in_f).T
    b2 = jnp.pad((b / scale).reshape(n_heads, d_head),
                 ((0, 0), (0, d_pad - d_head))).reshape(n_heads * d_pad)
    return w_t.astype(jnp.float32), b2.astype(jnp.float32)


def _pack_params(params, inv_scale, n_heads, k_dim, v_dim, dk_pad, dv_pad):
    wq_t, bq_row = _pad_heads(params["wq"], params["bq"], n_heads, k_dim, dk_pad)
    # Fold 1/inv_scale_factor into the K projection (kills the in-kernel divide).
    wk_t, bk_row = _pad_heads(params["wk"], params["bk"], n_heads, k_dim, dk_pad,
                              scale=inv_scale)
    wv_t, bv_row = _pad_heads(params["wv"], params["bv"], n_heads, v_dim, dv_pad)

    k_in, v_in = wk_t.shape[0], wv_t.shape[0]
    hk, hv = n_heads * dk_pad, n_heads * dv_pad

    # Q projection with the bias folded in as an extra weight row.
    wq_aug = jnp.concatenate([wq_t, bq_row[None, :]], axis=0).astype(jnp.bfloat16)

    # K/V projections fused into one block-diagonal matmul + fused bias row.
    top = jnp.concatenate([wk_t, jnp.zeros((k_in, hv), jnp.float32)], axis=1)
    bot = jnp.concatenate([jnp.zeros((v_in, hk), jnp.float32), wv_t], axis=1)
    bias = jnp.concatenate([bk_row, bv_row])[None, :]
    wkv_aug = jnp.concatenate([top, bot, bias], axis=0).astype(jnp.bfloat16)
    return wq_aug, wkv_aug


def multi_head_attention(query, key, value, inv_scale_factor, params,
                         *, n_heads, k_dim, v_dim):
    B, Sq, q_in = query.shape
    _, Sk, k_in = key.shape
    _, _, v_in = value.shape

    # Sublane guard: per-batch / per-head row chunks must be whole (8,128)
    # tiles, otherwise the in-kernel slices/concats and the output store stop
    # being free.  Pad S host-side if this ever fails.
    assert Sq % _SUBLANES == 0 and Sk % _SUBLANES == 0, "Sq/Sk must be multiples of 8"

    dk_pad = _round_up(k_dim, _LANES)
    dv_pad = _round_up(v_dim, _LANES)
    hk_pad = n_heads * dk_pad
    hv_pad = n_heads * dv_pad

    wq_aug, wkv_aug = _pack_params(params, inv_scale_factor, n_heads,
                                   k_dim, v_dim, dk_pad, dv_pad)

    # Constant-1 column appended -> biases ride inside the matmuls.
    q_aug = jnp.concatenate([query, jnp.ones((B, Sq, 1), query.dtype)], axis=-1)
    kv_aug = jnp.concatenate([key, value, jnp.ones((B, Sk, 1), key.dtype)], axis=-1)
    q2 = q_aug.reshape(B * Sq, q_in + 1)
    kv2 = kv_aug.reshape(B * Sk, k_in + v_in + 1)

    # Grid strategy (per review): collapse batch on single-TC chips (v5e/v6e);
    # keep one batch element per "parallel" grid step on v7x's two cores.
    bb = B if _tensorcores_per_device() == 1 else 1
    if B % bb:
        bb = 1
    n_steps = B // bb

    kernel = functools.partial(mha_kernel, n_heads=n_heads, dk_pad=dk_pad,
                               dv_pad=dv_pad, bb=bb, sq=Sq, sk=Sk)

    out_rows = n_heads * Sq
    out_p = pl.pallas_call(
        kernel,
        out_shape=jax.ShapeDtypeStruct((B * out_rows, dv_pad), jnp.float32),
        grid=(n_steps,),
        in_specs=[
            pl.BlockSpec((bb * Sq, q_in + 1), lambda i: (i, 0)),              # query (+1 col)
            pl.BlockSpec((bb * Sk, k_in + v_in + 1), lambda i: (i, 0)),       # key‖value (+1 col)
            # Constant index_map -> Pallas skips re-DMA of these across steps.
            pl.BlockSpec((q_in + 1, hk_pad), lambda i: (0, 0)),               # [Wq^T ; bq]
            pl.BlockSpec((k_in + v_in + 1, hk_pad + hv_pad), lambda i: (0, 0)),  # blkdiag(Wk/s, Wv) ; [bk/s, bv]
        ],
        out_specs=pl.BlockSpec((bb * out_rows, dv_pad), lambda i: (i, 0)),
        compiler_params=pltpu.CompilerParams(
            dimension_semantics=("parallel",)),
    )(q2, kv2, wq_aug, wkv_aug)

    # TODO(synk): the reference _combine_heads reshapes to 2-D then calls
    # permute(0,2,1,3), which raises in PyTorch; implementing the intended
    # (B, H*Sq, Dv) -> (B, Sq, H*Dv) merge here (plain XLA, outside the
    # kernel).  Lane padding is stripped BEFORE the transpose so only v_dim
    # (not dv_pad) columns are moved.
    out = out_p.reshape(B, n_heads, Sq, dv_pad)[..., :v_dim]
    return out.transpose(0, 2, 1, 3).reshape(B, Sq, n_heads * v_dim)


def reference_forward(query, key, value, inv_scale, params, n_heads, k_dim, v_dim):
    """Pure-JAX f32 reference mirroring the PyTorch forward (eval mode)."""
    q = query @ params["wq"].T + params["bq"]
    k = key @ params["wk"].T + params["bk"]
    v = value @ params["wv"].T + params["bv"]

    def split(t, H):
        B, S, HD = t.shape
        D = HD // H
        return t.reshape(B, S, H, D).transpose(0, 2, 1, 3).reshape(B, H * S, D)

    qh, kh, vh = split(q, n_heads), split(k, n_heads), split(v, n_heads)
    s = qh @ (jnp.swapaxes(kh, -2, -1) / inv_scale)
    p = jax.nn.softmax(s, axis=-1)
    o = p @ vh
    B = o.shape[0]
    S = o.shape[1] // n_heads
    return o.reshape(B, n_heads, S, v_dim).transpose(0, 2, 1, 3).reshape(B, S, n_heads * v_dim)


if __name__ == "__main__":
    # Small shapes consistent with the module.
    B, Sq, Sk = 2, 8, 8
    q_dim, k_dim, v_dim, n_heads = 32, 16, 16, 2
    inv_scale_factor = 2.0

    root = jax.random.PRNGKey(0)
    keys = jax.random.split(root, 9)

    def linear_init(kw, kb, out_f, in_f):
        bound = 1.0 / jnp.sqrt(in_f)
        w = jax.random.uniform(kw, (out_f, in_f), jnp.float32, -bound, bound)
        b = jax.random.uniform(kb, (out_f,), jnp.float32, -bound, bound)
        return w, b

    wq, bq = linear_init(keys[0], keys[1], n_heads * k_dim, q_dim)
    wk, bk = linear_init(keys[2], keys[3], n_heads * k_dim, k_dim)
    wv, bv = linear_init(keys[4], keys[5], n_heads * v_dim, v_dim)
    params = {"wq": wq, "bq": bq, "wk": wk, "bk": bk, "wv": wv, "bv": bv}

    query = jax.random.normal(keys[6], (B, Sq, q_dim), jnp.float32)
    key_ = jax.random.normal(keys[7], (B, Sk, k_dim), jnp.float32)
    value = jax.random.normal(keys[8], (B, Sk, v_dim), jnp.float32)

    out = multi_head_attention(query, key_, value, inv_scale_factor, params,
                               n_heads=n_heads, k_dim=k_dim, v_dim=v_dim)
    out = jax.block_until_ready(out)

    ref = reference_forward(query, key_, value, inv_scale_factor, params,
                            n_heads, k_dim, v_dim)
    assert out.shape == (B, Sq, n_heads * v_dim)
    # Tolerance vs the f32 reference: bf16 MXU matmuls (incl. bf16 bias rows)
    # introduce small, expected drift.
    assert jnp.allclose(out, ref, rtol=3e-2, atol=3e-2), "mismatch vs JAX reference"

    print("KERNEL_OK")
</pallas_src>

<mosaic_0001>
module attributes {stable_mosaic.version = 11 : i64} {
  func.func @mha_kernel(%arg0: i32, %arg1: memref<16x33xf32, #tpu.memory_space<vmem>>, %arg2: memref<16x33xf32, #tpu.memory_space<vmem>>, %arg3: memref<33x256xbf16, #tpu.memory_space<vmem>>, %arg4: memref<33x512xbf16, #tpu.memory_space<vmem>>, %arg5: memref<32x128xf32, #tpu.memory_space<vmem>>) attributes {dimension_semantics = [#tpu.dimension_semantics<parallel>], iteration_bounds = array<i64: 1>, scalar_prefetch = 0 : i64, scratch_operands = 0 : i64, tpu.core_type = #tpu.core_type<tc>, window_params = [{transform_indices = @transform_0, window_bounds = array<i64: 16, 33>}, {transform_indices = @transform_1, window_bounds = array<i64: 16, 33>}, {pipeline_mode = #tpu.pipeline_mode<synchronous>, transform_indices = @transform_2, window_bounds = array<i64: 33, 256>}, {pipeline_mode = #tpu.pipeline_mode<synchronous>, transform_indices = @transform_3, window_bounds = array<i64: 33, 512>}, {transform_indices = @transform_4, window_bounds = array<i64: 32, 128>}]} {
    %c0 = arith.constant 0 : index
    %c0_0 = arith.constant 0 : index
    %0 = vector.load %arg1[%c0, %c0_0] : memref<16x33xf32, #tpu.memory_space<vmem>>, vector<16x33xf32>
    %1 = arith.truncf %0 : vector<16x33xf32> to vector<16x33xbf16>
    %c0_1 = arith.constant 0 : index
    %c0_2 = arith.constant 0 : index
    %2 = vector.load %arg3[%c0_1, %c0_2] : memref<33x256xbf16, #tpu.memory_space<vmem>>, vector<33x256xbf16>
    %cst = arith.constant dense<0.000000e+00> : vector<16x256xf32>
    %3 = tpu.matmul %1, %2, %cst {dimension_numbers = #tpu.dot_dimension_numbers<[1], [0], [0], [1], [0, 0, 1, 1], [], []>} : vector<16x33xbf16>, vector<33x256xbf16>, vector<16x256xf32> -> vector<16x256xf32>
    %c0_3 = arith.constant 0 : index
    %c0_4 = arith.constant 0 : index
    %4 = vector.load %arg2[%c0_3, %c0_4] : memref<16x33xf32, #tpu.memory_space<vmem>>, vector<16x33xf32>
    %5 = arith.truncf %4 : vector<16x33xf32> to vector<16x33xbf16>
    %c0_5 = arith.constant 0 : index
    %c0_6 = arith.constant 0 : index
    %6 = vector.load %arg4[%c0_5, %c0_6] : memref<33x512xbf16, #tpu.memory_space<vmem>>, vector<33x512xbf16>
    %cst_7 = arith.constant dense<0.000000e+00> : vector<16x512xf32>
    %7 = tpu.matmul %5, %6, %cst_7 {dimension_numbers = #tpu.dot_dimension_numbers<[1], [0], [0], [1], [0, 0, 1, 1], [], []>} : vector<16x33xbf16>, vector<33x512xbf16>, vector<16x512xf32> -> vector<16x512xf32>
    %8 = vector.extract_strided_slice %3 {offsets = [0, 0], sizes = [8, 256], strides = [1, 1]} : vector<16x256xf32> to vector<8x256xf32>
    %9 = vector.extract_strided_slice %7 {offsets = [0, 0], sizes = [8, 256], strides = [1, 1]} : vector<16x512xf32> to vector<8x256xf32>
    %10 = vector.extract_strided_slice %7 {offsets = [0, 256], sizes = [8, 256], strides = [1, 1]} : vector<16x512xf32> to vector<8x256xf32>
    %11 = vector.extract_strided_slice %8 {offsets = [0, 0], sizes = [8, 128], strides = [1, 1]} : vector<8x256xf32> to vector<8x128xf32>
    %12 = vector.extract_strided_slice %8 {offsets = [0, 128], sizes = [8, 128], strides = [1, 1]} : vector<8x256xf32> to vector<8x128xf32>
    %13 = tpu.concatenate %11, %12 in 0 : vector<8x128xf32>, vector<8x128xf32> -> vector<16x128xf32>
    %14 = vector.extract_strided_slice %9 {offsets = [0, 0], sizes = [8, 128], strides = [1, 1]} : vector<8x256xf32> to vector<8x128xf32>
    %15 = vector.extract_strided_slice %9 {offsets = [0, 128], sizes = [8, 128], strides = [1, 1]} : vector<8x256xf32> to vector<8x128xf32>
    %16 = tpu.concatenate %14, %15 in 0 : vector<8x128xf32>, vector<8x128xf32> -> vector<16x128xf32>
    %17 = vector.extract_strided_slice %10 {offsets = [0, 0], sizes = [8, 128], strides = [1, 1]} : vector<8x256xf32> to vector<8x128xf32>
    %18 = vector.extract_strided_slice %10 {offsets = [0, 128], sizes = [8, 128], strides = [1, 1]} : vector<8x256xf32> to vector<8x128xf32>
    %19 = tpu.concatenate %17, %18 in 0 : vector<8x128xf32>, vector<8x128xf32> -> vector<16x128xf32>
    %20 = arith.truncf %13 : vector<16x128xf32> to vector<16x128xbf16>
    %21 = arith.truncf %16 : vector<16x128xf32> to vector<16x128xbf16>
    %cst_8 = arith.constant dense<0.000000e+00> : vector<16x16xf32>
    %22 = tpu.matmul %20, %21, %cst_8 {dimension_numbers = #tpu.dot_dimension_numbers<[1], [1], [0], [0], [0, 0, 1, 0], [], []>} : vector<16x128xbf16>, vector<16x128xbf16>, vector<16x16xf32> -> vector<16x16xf32>
    %cst_9 = arith.constant dense<0xFF800000> : vector<16xf32>
    %23 = vector.multi_reduction <maximumf>, %22, %cst_9 [1] : vector<16x16xf32> to vector<16xf32>
    %24 = vector.shape_cast %23 : vector<16xf32> to vector<16x1xf32>
    %25 = vector.broadcast %24 : vector<16x1xf32> to vector<16x16xf32>
    %26 = arith.subf %22, %25 : vector<16x16xf32>
    %27 = math.exp %26 : vector<16x16xf32>
    %cst_10 = arith.constant dense<0.000000e+00> : vector<16xf32>
    %28 = vector.multi_reduction <add>, %27, %cst_10 [1] : vector<16x16xf32> to vector<16xf32>
    %29 = vector.shape_cast %28 : vector<16xf32> to vector<16x1xf32>
    %30 = arith.truncf %27 : vector<16x16xf32> to vector<16x16xbf16>
    %31 = arith.truncf %19 : vector<16x128xf32> to vector<16x128xbf16>
    %cst_11 = arith.constant dense<0.000000e+00> : vector<16x128xf32>
    %32 = tpu.matmul %30, %31, %cst_11 {dimension_numbers = #tpu.dot_dimension_numbers<[1], [0], [0], [1], [0, 0, 1, 1], [], []>} : vector<16x16xbf16>, vector<16x128xbf16>, vector<16x128xf32> -> vector<16x128xf32>
    %33 = tpu.reciprocal %29 : vector<16x1xf32> -> vector<16x1xf32>
    %34 = vector.broadcast %33 : vector<16x1xf32> to vector<16x128xf32>
    %35 = arith.mulf %32, %34 : vector<16x128xf32>
    %c0_12 = arith.constant 0 : index
    %c0_13 = arith.constant 0 : index
    %36 = vector.load %arg5[%c0_12, %c0_13] : memref<32x128xf32, #tpu.memory_space<vmem>>, vector<16x128xf32>
    tpu.vector_store %arg5[%c0_12, %c0_13], %35 {strides = array<i32>} : memref<32x128xf32, #tpu.memory_space<vmem>>, vector<16x128xf32>,
    %37 = vector.extract_strided_slice %3 {offsets = [8, 0], sizes = [8, 256], strides = [1, 1]} : vector<16x256xf32> to vector<8x256xf32>
    %38 = vector.extract_strided_slice %7 {offsets = [8, 0], sizes = [8, 256], strides = [1, 1]} : vector<16x512xf32> to vector<8x256xf32>
    %39 = vector.extract_strided_slice %7 {offsets = [8, 256], sizes = [8, 256], strides = [1, 1]} : vector<16x512xf32> to vector<8x256xf32>
    %40 = vector.extract_strided_slice %37 {offsets = [0, 0], sizes = [8, 128], strides = [1, 1]} : vector<8x256xf32> to vector<8x128xf32>
    %41 = vector.extract_strided_slice %37 {offsets = [0, 128], sizes = [8, 128], strides = [1, 1]} : vector<8x256xf32> to vector<8x128xf32>
    %42 = tpu.concatenate %40, %41 in 0 : vector<8x128xf32>, vector<8x128xf32> -> vector<16x128xf32>
    %43 = vector.extract_strided_slice %38 {offsets = [0, 0], sizes = [8, 128], strides = [1, 1]} : vector<8x256xf32> to vector<8x128xf32>
    %44 = vector.extract_strided_slice %38 {offsets = [0, 128], sizes = [8, 128], strides = [1, 1]} : vector<8x256xf32> to vector<8x128xf32>
    %45 = tpu.concatenate %43, %44 in 0 : vector<8x128xf32>, vector<8x128xf32> -> vector<16x128xf32>
    %46 = vector.extract_strided_slice %39 {offsets = [0, 0], sizes = [8, 128], strides = [1, 1]} : vector<8x256xf32> to vector<8x128xf32>
    %47 = vector.extract_strided_slice %39 {offsets = [0, 128], sizes = [8, 128], strides = [1, 1]} : vector<8x256xf32> to vector<8x128xf32>
    %48 = tpu.concatenate %46, %47 in 0 : vector<8x128xf32>, vector<8x128xf32> -> vector<16x128xf32>
    %49 = arith.truncf %42 : vector<16x128xf32> to vector<16x128xbf16>
    %50 = arith.truncf %45 : vector<16x128xf32> to vector<16x128xbf16>
    %cst_14 = arith.constant dense<0.000000e+00> : vector<16x16xf32>
    %51 = tpu.matmul %49, %50, %cst_14 {dimension_numbers = #tpu.dot_dimension_numbers<[1], [1], [0], [0], [0, 0, 1, 0], [], []>} : vector<16x128xbf16>, vector<16x128xbf16>, vector<16x16xf32> -> vector<16x16xf32>
    %cst_15 = arith.constant dense<0xFF800000> : vector<16xf32>
    %52 = vector.multi_reduction <maximumf>, %51, %cst_15 [1] : vector<16x16xf32> to vector<16xf32>
    %53 = vector.shape_cast %52 : vector<16xf32> to vector<16x1xf32>
    %54 = vector.broadcast %53 : vector<16x1xf32> to vector<16x16xf32>
    %55 = arith.subf %51, %54 : vector<16x16xf32>
    %56 = math.exp %55 : vector<16x16xf32>
    %cst_16 = arith.constant dense<0.000000e+00> : vector<16xf32>
    %57 = vector.multi_reduction <add>, %56, %cst_16 [1] : vector<16x16xf32> to vector<16xf32>
    %58 = vector.shape_cast %57 : vector<16xf32> to vector<16x1xf32>
    %59 = arith.truncf %56 : vector<16x16xf32> to vector<16x16xbf16>
    %60 = arith.truncf %48 : vector<16x128xf32> to vector<16x128xbf16>
    %cst_17 = arith.constant dense<0.000000e+00> : vector<16x128xf32>
    %61 = tpu.matmul %59, %60, %cst_17 {dimension_numbers = #tpu.dot_dimension_numbers<[1], [0], [0], [1], [0, 0, 1, 1], [], []>} : vector<16x16xbf16>, vector<16x128xbf16>, vector<16x128xf32> -> vector<16x128xf32>
    %62 = tpu.reciprocal %58 : vector<16x1xf32> -> vector<16x1xf32>
    %63 = vector.broadcast %62 : vector<16x1xf32> to vector<16x128xf32>
    %64 = arith.mulf %61, %63 : vector<16x128xf32>
    %c16 = arith.constant 16 : index
    %c0_18 = arith.constant 0 : index
    %65 = vector.load %arg5[%c16, %c0_18] : memref<32x128xf32, #tpu.memory_space<vmem>>, vector<16x128xf32>
    tpu.vector_store %arg5[%c16, %c0_18], %64 {strides = array<i32>} : memref<32x128xf32, #tpu.memory_space<vmem>>, vector<16x128xf32>,
    return
  }
  func.func @transform_0(%arg0: i32) -> (i32, i32) {
    %c0_i32 = arith.constant 0 : i32
    %c0_i32_0 = arith.constant 0 : i32
    return %arg0, %c0_i32 : i32, i32
  }
  func.func @transform_1(%arg0: i32) -> (i32, i32) {
    %c0_i32 = arith.constant 0 : i32
    %c0_i32_0 = arith.constant 0 : i32
    return %arg0, %c0_i32 : i32, i32
  }
  func.func @transform_2(%arg0: i32) -> (i32, i32) {
    %c0_i32 = arith.constant 0 : i32
    %c0_i32_0 = arith.constant 0 : i32
    %c0_i32_1 = arith.constant 0 : i32
    return %c0_i32, %c0_i32_0 : i32, i32
  }
  func.func @transform_3(%arg0: i32) -> (i32, i32) {
    %c0_i32 = arith.constant 0 : i32
    %c0_i32_0 = arith.constant 0 : i32
    %c0_i32_1 = arith.constant 0 : i32
    return %c0_i32, %c0_i32_0 : i32, i32
  }
  func.func @transform_4(%arg0: i32) -> (i32, i32) {
    %c0_i32 = arith.constant 0 : i32
    %c0_i32_0 = arith.constant 0 : i32
    return %arg0, %c0_i32 : i32, i32
  }
}

</mosaic_0001>

<llo_original>
// kernel: tpu_custom_call.1
$region0: #{tpu_custom_call.1}
  #allocation0 [shape = 'u32[]', space=smem, size = 0x4, offset = 0x4, fixed_abs, tag = 'smem constant byte address 0x4 - core index']
  #allocation1 [shape = 'u32[144,128]{1,0:T(1,128)}', space=vmem, size = 0x12000, scoped, tag = 'internal scratch']
  %s0 = inlined_call_operand.hbm [shape: f32[16,33], index: 0, kind: input, shape index: {}]
  %s1 = inlined_call_operand.hbm [shape: f32[16,33], index: 1, kind: input, shape index: {}]
  %s2 = inlined_call_operand.hbm [shape: bf16[33,256], index: 2, kind: input, shape index: {}]
  %s3 = inlined_call_operand.hbm [shape: bf16[33,512], index: 3, kind: input, shape index: {}]
  %s4 = inlined_call_operand.hbm [shape: f32[32,128], index: 4, kind: output, shape index: {}]
  %s5 = sld [smem:[#allocation0]]
  $region42: #{tpu_custom_call.1} parent=0
    _
  %s7 = ssub.s32 1, %s5
  %s8 = scalar_select 0, %s7, %s5
  $region1: #{tpu_custom_call.1} parent=0
    #allocation2 [shape = 'u8[8192]{0}', space=vmem, size = 0x2000, scoped, tag = 'input window, operand 0, single buffered']
    #allocation3 [shape = 's32[1]{0}', space=sflag, size = 0x4, scoped, tag = 'scoped memory for tpu_custom_call.1']
    #allocation4 [shape = 's32[1]{0}', space=sflag, size = 0x4, scoped, tag = 'scoped memory for tpu_custom_call.1']
    #allocation5 [shape = 'u8[8192]{0}', space=vmem, size = 0x2000, scoped, tag = 'input window, operand 1, single buffered']
    #allocation6 [shape = 's32[1]{0}', space=sflag, size = 0x4, scoped, tag = 'scoped memory for tpu_custom_call.1']
    #allocation7 [shape = 'u8[20480]{0}', space=vmem, size = 0x5000, scoped, tag = 'input window, operand 2, single buffered']
    #allocation8 [shape = 'u8[40960]{0}', space=vmem, size = 0xa000, scoped, tag = 'input window, operand 3, single buffered']
    #allocation9 [shape = 's32[1]{0}', space=sflag, size = 0x4, scoped, tag = 'scoped memory for tpu_custom_call.1']
    #allocation10 [shape = 'u8[16384]{0}', space=vmem, size = 0x4000, scoped, tag = 'output window, operand 0, single buffered']
    %9 = vsyncpa [#allocation3], 0
    %10 = vsyncpa [#allocation6], 0
    %11 = vsyncpa [#allocation9], 0
    %12 = vsyncpa [#allocation4], 0
    // Predicated region
    $region2: #{tpu_custom_call.1} parent=1 // pred_check
      _
    $region3: #{tpu_custom_call.1} parent=1 // pred_check_branch
      %14 = sbr.rel (0) target = $region5
    $region4: #{tpu_custom_call.1} parent=1 // pred_region
      %s16 = ssub.s32 256, 256
      %17 = vsyncadd [#allocation3], %s16
      %s18 = sshll.u32 [#allocation2], 4
      %s19 = int_to_ptr.vmem [resolvable:$true] %s18
      %24 = dma.hbm_to_vmem [thread:$0]  %s0, 256, %s19, [#allocation3], 128, 128, 8
    $region5: #{tpu_custom_call.1} parent=1 // pred_fallthru
      _
    // Predicated region
    $region6: #{tpu_custom_call.1} parent=1 // pred_check
      _
    $region7: #{tpu_custom_call.1} parent=1 // pred_check_branch
      %26 = sbr.rel (0) target = $region9
    $region8: #{tpu_custom_call.1} parent=1 // pred_region
      %s28 = ssub.s32 256, 256
      %29 = vsyncadd [#allocation6], %s28
      %s30 = sshll.u32 [#allocation5], 4
      %s31 = int_to_ptr.vmem [resolvable:$true] %s30
      %36 = dma.hbm_to_vmem [thread:$0]  %s1, 256, %s31, [#allocation6], 128, 128, 8
    $region9: #{tpu_custom_call.1} parent=1 // pred_fallthru
      _
    // Predicated region
    $region10: #{tpu_custom_call.1} parent=1 // pred_check
      _
    $region11: #{tpu_custom_call.1} parent=1 // pred_check_branch
      %38 = sbr.rel (0) target = $region13
    $region12: #{tpu_custom_call.1} parent=1 // pred_region
      %s40 = ssub.s32 640, 640
      %41 = vsyncadd [#allocation6], %s40
      %s42 = sshll.u32 [#allocation7], 4
      %s43 = int_to_ptr.vmem [resolvable:$true] %s42
      %48 = dma.hbm_to_vmem [thread:$0]  %s2, 640, %s43, [#allocation6], 128, 128, 8
    $region13: #{tpu_custom_call.1} parent=1 // pred_fallthru
      _
    // Predicated region
    $region14: #{tpu_custom_call.1} parent=1 // pred_check
      _
    $region15: #{tpu_custom_call.1} parent=1 // pred_check_branch
      %50 = sbr.rel (0) target = $region17
    $region16: #{tpu_custom_call.1} parent=1 // pred_region
      %s52 = ssub.s32 1280, 1280
      %53 = vsyncadd [#allocation9], %s52
      %s54 = sshll.u32 [#allocation8], 4
      %s55 = int_to_ptr.vmem [resolvable:$true] %s54
      %60 = dma.hbm_to_vmem [thread:$0]  %s3, 1280, %s55, [#allocation9], 256, 256, 16
    $region17: #{tpu_custom_call.1} parent=1 // pred_fallthru
      _
    // Predicated region
    $region18: #{tpu_custom_call.1} parent=1 // pred_check
      _
    $region19: #{tpu_custom_call.1} parent=1 // pred_check_branch
      %62 = sbr.rel (0) target = $region21
    $region20: #{tpu_custom_call.1} parent=1 // pred_region
      %63 = dma.done [#allocation3], 256
    $region21: #{tpu_custom_call.1} parent=1 // pred_fallthru
      _
    // Predicated region
    $region22: #{tpu_custom_call.1} parent=1 // pred_check
      _
    $region23: #{tpu_custom_call.1} parent=1 // pred_check_branch
      %65 = sbr.rel (0) target = $region25
    $region24: #{tpu_custom_call.1} parent=1 // pred_region
      %66 = dma.done [#allocation6], 256
    $region25: #{tpu_custom_call.1} parent=1 // pred_fallthru
      _
    // Predicated region
    $region26: #{tpu_custom_call.1} parent=1 // pred_check
      _
    $region27: #{tpu_custom_call.1} parent=1 // pred_check_branch
      %68 = sbr.rel (0) target = $region29
    $region28: #{tpu_custom_call.1} parent=1 // pred_region
      %69 = dma.done [#allocation6], 640
    $region29: #{tpu_custom_call.1} parent=1 // pred_fallthru
      _
    // Predicated region
    $region30: #{tpu_custom_call.1} parent=1 // pred_check
      _
    $region31: #{tpu_custom_call.1} parent=1 // pred_check_branch
      %71 = sbr.rel (0) target = $region33
    $region32: #{tpu_custom_call.1} parent=1 // pred_region
      %72 = dma.done [#allocation9], 1280
    $region33: #{tpu_custom_call.1} parent=1 // pred_fallthru
      _
    %v74 = vld [vmem:[#allocation2] sm:$0xff]
    %v75 = vld [vmem:[#allocation2 + $0x8] sm:$0xff]
    %v76 = vpack.c.bf16 %v75, %v74
    %v77 = vld [vmem:[#allocation7] sm:$0xff]
    %v78 = vld [vmem:[#allocation7 + $0x8] sm:$0xff]
    %v79 = vld [vmem:[#allocation7 + $0x10] sm:$0xff]
    %v80 = vld [vmem:[#allocation7 + $0x18] sm:$0xff]
    %v81 = vld [vmem:[#allocation7 + $0x20] sm:$0x11]
    %v87 = vunpack.c.l.b16 %v77
    %v88 = vunpack.c.h.b16 %v77
    %v89 = vunpack.c.l.b16 %v78
    %v90 = vunpack.c.h.b16 %v78
    %v91 = vunpack.c.l.b16 %v79
    %v92 = vunpack.c.h.b16 %v79
    %v93 = vunpack.c.l.b16 %v80
    %v94 = vunpack.c.h.b16 %v80
    %v95 = vunpack.c.l.b16 %v81
    %v96 = vunpack.c.h.b16 %v81
    %v97 = vpack.c.b16 %v89, %v87
    %v98 = vpack.c.b16 %v90, %v88
    %v99 = vpack.c.b16 %v93, %v91
    %v100 = vpack.c.b16 %v94, %v92
    %v101 = vpack.c.b16 %v95, %v95
    %v102 = vpack.c.b16 %v96, %v96
    %vm107 = vcmask 269312
    %v109 = vsel %vm107, %v76, 0
    %vm111 = vcmask 1040384
    %v112 = vsel 0, 4294967295, 65535
    %v113 = vsel %vm111, %v112, 0
    %v115 = vand.u32 %v101, %v113
    %v118 = vand.u32 %v102, %v113
    %120 = vmatprep.subr.bf16.mxu0 %v98
    %121 = vmatpush1.bf16.msra.mxu0 %v97
    %122 = vmatprep.subr.bf16.mxu0 %v100
    %123 = vmatpush1.bf16.msra.mxu0 %v99
    %124 = vmatprep.subr.bf16.mxu0 %v118
    %125 = vmatpush1.bf16.msra.mxu0 %v115
    %126 = vmatprep.subr.bf16.mxu0 0
    %127 = vmatpush1.bf16.msra.mxu0 0
    %128 = vmatprep.subr.bf16.mxu0 0
    %129 = vmatpush1.bf16.msra.mxu0 0
    %130 = vmatprep.subr.bf16.mxu0 0
    %131 = vmatpush1.bf16.msra.mxu0 0
    %132 = vmatprep.subr.bf16.mxu0 0
    %133 = vmatpush1.bf16.msra.mxu0 0
    %134 = vmatprep.subr.bf16.mxu0 0
    %135 = vmatpush1.bf16.msra.mxu0 0
    %136 = vmatprep.subr.bf16.mxu0 0
    %137 = vmatpush1.bf16.msra.mxu0 0
    %138 = vmatprep.subr.bf16.mxu0 0
    %139 = vmatpush1.bf16.msra.mxu0 0
    %140 = vmatprep.subr.bf16.mxu0 0
    %141 = vmatpush1.bf16.msra.mxu0 0
    %142 = vmatprep.subr.bf16.mxu0 0
    %143 = vmatpush1.bf16.msra.mxu0 0
    %144 = vmatprep.subr.bf16.mxu0 0
    %145 = vmatpush1.bf16.msra.mxu0 0
    %146 = vmatprep.subr.bf16.mxu0 0
    %147 = vmatpush1.bf16.msra.mxu0 0
    %148 = vmatprep.subr.bf16.mxu0 0
    %149 = vmatpush1.bf16.msra.mxu0 0
    %150 = vmatprep.subr.bf16.mxu0 0
    %151 = vmatpush1.bf16.msra.mxu0 0
    %152 = vmatprep.mubr.bf16.mxu0 0
    %153 = vmatmul.mubr.bf16.gmra.mrb[0].mxu0 %v109
    %v154 = vpop.f32.mrb[0].mxu0
    %v155 = vadd.f32 0.0, %v154
    %v156 = vpop.f32.mrb[0].mxu0
    %v157 = vadd.f32 0.0, %v156
    %v158 = vpop.f32.mrb[0].mxu0
    %v159 = vadd.f32 0.0, %v158
    %v160 = vpop.f32.mrb[0].mxu0
    %v161 = vadd.f32 0.0, %v160
    %162 = vdwg.mxu0
    %v163 = vld [vmem:[#allocation5] sm:$0xff]
    %v164 = vld [vmem:[#allocation5 + $0x8] sm:$0xff]
    %v165 = vpack.c.bf16 %v164, %v163
    %v166 = vld [vmem:[#allocation8] sm:$0xff]
    %v167 = vld [vmem:[#allocation8 + $0x8] sm:$0xff]
    %v168 = vld [vmem:[#allocation8 + $0x10] sm:$0xff]
    %v169 = vld [vmem:[#allocation8 + $0x18] sm:$0xff]
    %v170 = vld [vmem:[#allocation8 + $0x20] sm:$0xff]
    %v171 = vld [vmem:[#allocation8 + $0x28] sm:$0xff]
    %v172 = vld [vmem:[#allocation8 + $0x30] sm:$0xff]
    %v173 = vld [vmem:[#allocation8 + $0x38] sm:$0xff]
    %v174 = vld [vmem:[#allocation8 + $0x40] sm:$0x11]
    %v175 = vld [vmem:[#allocation8 + $0x48] sm:$0x11]
    %v186 = vunpack.c.l.b16 %v166
    %v187 = vunpack.c.h.b16 %v166
    %v188 = vunpack.c.l.b16 %v167
    %v189 = vunpack.c.h.b16 %v167
    %v190 = vunpack.c.l.b16 %v168
    %v191 = vunpack.c.h.b16 %v168
    %v192 = vunpack.c.l.b16 %v169
    %v193 = vunpack.c.h.b16 %v169
    %v194 = vunpack.c.l.b16 %v170
    %v195 = vunpack.c.h.b16 %v170
    %v196 = vunpack.c.l.b16 %v171
    %v197 = vunpack.c.h.b16 %v171
    %v198 = vunpack.c.l.b16 %v172
    %v199 = vunpack.c.h.b16 %v172
    %v200 = vunpack.c.l.b16 %v173
    %v201 = vunpack.c.h.b16 %v173
    %v202 = vunpack.c.l.b16 %v174
    %v203 = vunpack.c.h.b16 %v174
    %v204 = vunpack.c.l.b16 %v175
    %v205 = vunpack.c.h.b16 %v175
    %v206 = vpack.c.b16 %v190, %v186
    %v207 = vpack.c.b16 %v191, %v187
    %v208 = vpack.c.b16 %v192, %v188
    %v209 = vpack.c.b16 %v193, %v189
    %v210 = vpack.c.b16 %v198, %v194
    %v211 = vpack.c.b16 %v199, %v195
    %v212 = vpack.c.b16 %v200, %v196
    %v213 = vpack.c.b16 %v201, %v197
    %v214 = vpack.c.b16 %v202, %v202
    %v215 = vpack.c.b16 %v203, %v203
    %v216 = vpack.c.b16 %v204, %v204
    %v217 = vpack.c.b16 %v205, %v205
    %v227 = vsel %vm107, %v165, 0
    %v230 = vand.u32 %v214, %v113
    %v233 = vand.u32 %v215, %v113
    %v236 = vand.u32 %v216, %v113
    %v239 = vand.u32 %v217, %v113
    %241 = vmatprep.subr.bf16.mxu0 %v207
    %242 = vmatpush1.bf16.msra.mxu0 %v206
    %243 = vmatprep.subr.bf16.mxu0 %v211
    %244 = vmatpush1.bf16.msra.mxu0 %v210
    %245 = vmatprep.subr.bf16.mxu0 %v233
    %246 = vmatpush1.bf16.msra.mxu0 %v230
    %247 = vmatprep.subr.bf16.mxu0 0
    %248 = vmatpush1.bf16.msra.mxu0 0
    %249 = vmatprep.subr.bf16.mxu0 0
    %250 = vmatpush1.bf16.msra.mxu0 0
    %251 = vmatprep.subr.bf16.mxu0 0
    %252 = vmatpush1.bf16.msra.mxu0 0
    %253 = vmatprep.subr.bf16.mxu0 0
    %254 = vmatpush1.bf16.msra.mxu0 0
    %255 = vmatprep.subr.bf16.mxu0 0
    %256 = vmatpush1.bf16.msra.mxu0 0
    %257 = vmatprep.subr.bf16.mxu0 0
    %258 = vmatpush1.bf16.msra.mxu0 0
    %259 = vmatprep.subr.bf16.mxu0 0
    %260 = vmatpush1.bf16.msra.mxu0 0
    %261 = vmatprep.subr.bf16.mxu0 0
    %262 = vmatpush1.bf16.msra.mxu0 0
    %263 = vmatprep.subr.bf16.mxu0 0
    %264 = vmatpush1.bf16.msra.mxu0 0
    %265 = vmatprep.subr.bf16.mxu0 0
    %266 = vmatpush1.bf16.msra.mxu0 0
    %267 = vmatprep.subr.bf16.mxu0 0
    %268 = vmatpush1.bf16.msra.mxu0 0
    %269 = vmatprep.subr.bf16.mxu0 0
    %270 = vmatpush1.bf16.msra.mxu0 0
    %271 = vmatprep.subr.bf16.mxu0 0
    %272 = vmatpush1.bf16.msra.mxu0 0
    %273 = vmatprep.mubr.bf16.mxu0 0
    %274 = vmatmul.mubr.bf16.gmra.mrb[0].mxu0 %v227
    %v275 = vpop.f32.mrb[0].mxu0
    %v276 = vadd.f32 0.0, %v275
    %v277 = vpop.f32.mrb[0].mxu0
    %v278 = vadd.f32 0.0, %v277
    %v279 = vpop.f32.mrb[0].mxu0
    %v280 = vadd.f32 0.0, %v279
    %v281 = vpop.f32.mrb[0].mxu0
    %v282 = vadd.f32 0.0, %v281
    %283 = vdwg.mxu0
    %284 = vmatprep.subr.bf16.mxu0 %v209
    %285 = vmatpush1.bf16.msra.mxu0 %v208
    %286 = vmatprep.subr.bf16.mxu0 %v213
    %287 = vmatpush1.bf16.msra.mxu0 %v212
    %288 = vmatprep.subr.bf16.mxu0 %v239
    %289 = vmatpush1.bf16.msra.mxu0 %v236
    %290 = vmatprep.subr.bf16.mxu0 0
    %291 = vmatpush1.bf16.msra.mxu0 0
    %292 = vmatprep.subr.bf16.mxu0 0
    %293 = vmatpush1.bf16.msra.mxu0 0
    %294 = vmatprep.subr.bf16.mxu0 0
    %295 = vmatpush1.bf16.msra.mxu0 0
    %296 = vmatprep.subr.bf16.mxu0 0
    %297 = vmatpush1.bf16.msra.mxu0 0
    %298 = vmatprep.subr.bf16.mxu0 0
    %299 = vmatpush1.bf16.msra.mxu0 0
    %300 = vmatprep.subr.bf16.mxu0 0
    %301 = vmatpush1.bf16.msra.mxu0 0
    %302 = vmatprep.subr.bf16.mxu0 0
    %303 = vmatpush1.bf16.msra.mxu0 0
    %304 = vmatprep.subr.bf16.mxu0 0
    %305 = vmatpush1.bf16.msra.mxu0 0
    %306 = vmatprep.subr.bf16.mxu0 0
    %307 = vmatpush1.bf16.msra.mxu0 0
    %308 = vmatprep.subr.bf16.mxu0 0
    %309 = vmatpush1.bf16.msra.mxu0 0
    %310 = vmatprep.subr.bf16.mxu0 0
    %311 = vmatpush1.bf16.msra.mxu0 0
    %312 = vmatprep.subr.bf16.mxu0 0
    %313 = vmatpush1.bf16.msra.mxu0 0
    %314 = vmatprep.subr.bf16.mxu0 0
    %315 = vmatpush1.bf16.msra.mxu0 0
    %316 = vmatprep.mubr.bf16.mxu0 0
    %317 = vmatmul.mubr.bf16.gmra.mrb[0].mxu0 %v227
    %v318 = vpop.f32.mrb[0].mxu0
    %v319 = vadd.f32 0.0, %v318
    %v320 = vpop.f32.mrb[0].mxu0
    %v321 = vadd.f32 0.0, %v320
    %v322 = vpop.f32.mrb[0].mxu0
    %v323 = vadd.f32 0.0, %v322
    %v324 = vpop.f32.mrb[0].mxu0
    %v325 = vadd.f32 0.0, %v324
    %326 = vdwg.mxu0
    %v327 = vpack.c.bf16 %v157, %v155
    %v328 = vpack.c.bf16 %v278, %v276
    %329 = vmatprep.subr.bf16.mxu0 0
    %330 = vmatpush1.bf16.xpose.msra.mxu0 %v328
    %331 = vmatprep.subr.bf16.mxu0 0
    %332 = vmatpush1.bf16.xpose.msra.mxu0 0
    %333 = vmatprep.subr.bf16.mxu0 0
    %334 = vmatpush1.bf16.xpose.msra.mxu0 0
    %335 = vmatprep.subr.bf16.mxu0 0
    %336 = vmatpush1.bf16.xpose.msra.mxu0 0
    %337 = vmatprep.subr.bf16.mxu0 0
    %338 = vmatpush1.bf16.xpose.msra.mxu0 0
    %339 = vmatprep.subr.bf16.mxu0 0
    %340 = vmatpush1.bf16.xpose.msra.mxu0 0
    %341 = vmatprep.subr.bf16.mxu0 0
    %342 = vmatpush1.bf16.xpose.msra.mxu0 0
    %343 = vmatprep.subr.bf16.mxu0 0
    %344 = vmatpush1.bf16.xpose.msra.mxu0 0
    %345 = vmatprep.subr.bf16.mxu0 0
    %346 = vmatpush1.bf16.xpose.msra.mxu0 0
    %347 = vmatprep.subr.bf16.mxu0 0
    %348 = vmatpush1.bf16.xpose.msra.mxu0 0
    %349 = vmatprep.subr.bf16.mxu0 0
    %350 = vmatpush1.bf16.xpose.msra.mxu0 0
    %351 = vmatprep.subr.bf16.mxu0 0
    %352 = vmatpush1.bf16.xpose.msra.mxu0 0
    %353 = vmatprep.subr.bf16.mxu0 0
    %354 = vmatpush1.bf16.xpose.msra.mxu0 0
    %355 = vmatprep.subr.bf16.mxu0 0
    %356 = vmatpush1.bf16.xpose.msra.mxu0 0
    %357 = vmatprep.subr.bf16.mxu0 0
    %358 = vmatpush1.bf16.xpose.msra.mxu0 0
    %359 = vmatprep.subr.bf16.mxu0 0
    %360 = vmatpush1.bf16.xpose.msra.mxu0 0
    %361 = vmatprep.mubr.bf16.mxu0 0
    %362 = vmatmul.mubr.bf16.gmra.mrb[0].mxu0 %v327
    %v363 = vpop.f32.mrb[0].mxu0
    %v364 = vadd.f32 0.0, %v363
    %v365 = vpop.f32.mrb[0].mxu0
    %v366 = vpop.f32.mrb[0].mxu0
    %v367 = vadd.f32 0.0, %v366
    %v368 = vpop.f32.mrb[0].mxu0
    %369 = vdwg.mxu0
    %vm370 = vcmask 130048
    %v371 = vsel %vm370, %v364, -inf
    %372 = vmax.xlane.f32.xlu0 %v371
    %v373 = vpop.xlane.xlu0 %372
    %v374 = vsel %vm370, %v367, -inf
    %375 = vmax.xlane.f32.xlu0 %v374
    %v376 = vpop.xlane.xlu0 %375
    %v377 = vsub.f32 %v364, %v373
    %v378 = vsub.f32 %v367, %v376
    %v379 = vmul.f32 %v377, 1.442695
    %v380 = vpow.pop %v379
    %v381 = vmul.f32 %v378, 1.442695
    %v382 = vpow.pop %v381
    %v383 = vsel %vm370, %v380, 0.0
    %384 = vadd.xlane.f32.xlu0 %v383
    %v385 = vpop.xlane.xlu0 %384
    %v386 = vsel %vm370, %v382, 0.0
    %387 = vadd.xlane.f32.xlu0 %v386
    %v388 = vpop.xlane.xlu0 %387
    %v389 = vpack.c.bf16 %v382, %v380
    %v390 = vpack.c.bf16 %v321, %v319
    %v392 = vsel %vm370, %v389, 0
    %394 = vmatprep.subr.bf16.mxu0 0
    %395 = vmatpush1.bf16.msra.mxu0 %v390
    %396 = vmatprep.subr.bf16.mxu0 0
    %397 = vmatpush1.bf16.msra.mxu0 0
    %398 = vmatprep.subr.bf16.mxu0 0
    %399 = vmatpush1.bf16.msra.mxu0 0
    %400 = vmatprep.subr.bf16.mxu0 0
    %401 = vmatpush1.bf16.msra.mxu0 0
    %402 = vmatprep.subr.bf16.mxu0 0
    %403 = vmatpush1.bf16.msra.mxu0 0
    %404 = vmatprep.subr.bf16.mxu0 0
    %405 = vmatpush1.bf16.msra.mxu0 0
    %406 = vmatprep.subr.bf16.mxu0 0
    %407 = vmatpush1.bf16.msra.mxu0 0
    %408 = vmatprep.subr.bf16.mxu0 0
    %409 = vmatpush1.bf16.msra.mxu0 0
    %410 = vmatprep.subr.bf16.mxu0 0
    %411 = vmatpush1.bf16.msra.mxu0 0
    %412 = vmatprep.subr.bf16.mxu0 0
    %413 = vmatpush1.bf16.msra.mxu0 0
    %414 = vmatprep.subr.bf16.mxu0 0
    %415 = vmatpush1.bf16.msra.mxu0 0
    %416 = vmatprep.subr.bf16.mxu0 0
    %417 = vmatpush1.bf16.msra.mxu0 0
    %418 = vmatprep.subr.bf16.mxu0 0
    %419 = vmatpush1.bf16.msra.mxu0 0
    %420 = vmatprep.subr.bf16.mxu0 0
    %421 = vmatpush1.bf16.msra.mxu0 0
    %422 = vmatprep.subr.bf16.mxu0 0
    %423 = vmatpush1.bf16.msra.mxu0 0
    %424 = vmatprep.subr.bf16.mxu0 0
    %425 = vmatpush1.bf16.msra.mxu0 0
    %426 = vmatprep.mubr.bf16.mxu0 0
    %427 = vmatmul.mubr.bf16.gmra.mrb[0].mxu0 %v392
    %v428 = vpop.f32.mrb[0].mxu0
    %v429 = vadd.f32 0.0, %v428
    %v430 = vpop.f32.mrb[0].mxu0
    %v431 = vpop.f32.mrb[0].mxu0
    %v432 = vadd.f32 0.0, %v431
    %v433 = vpop.f32.mrb[0].mxu0
    %434 = vdwg.mxu0
    %v435 = vrcp.pop %v385
    %v436 = vrcp.pop %v388
    %v437 = vmul.f32 %v429, %v435
    %v438 = vmul.f32 %v432, %v436
    %439 = vst [vmem:[#allocation10] sm:$0xff] %v437
    %440 = vst [vmem:[#allocation10 + $0x8] sm:$0xff] %v438
    %v441 = vpack.c.bf16 %v161, %v159
    %v442 = vpack.c.bf16 %v282, %v280
    %443 = vmatprep.subr.bf16.mxu0 0
    %444 = vmatpush1.bf16.xpose.msra.mxu0 %v442
    %445 = vmatprep.subr.bf16.mxu0 0
    %446 = vmatpush1.bf16.xpose.msra.mxu0 0
    %447 = vmatprep.subr.bf16.mxu0 0
    %448 = vmatpush1.bf16.xpose.msra.mxu0 0
    %449 = vmatprep.subr.bf16.mxu0 0
    %450 = vmatpush1.bf16.xpose.msra.mxu0 0
    %451 = vmatprep.subr.bf16.mxu0 0
    %452 = vmatpush1.bf16.xpose.msra.mxu0 0
    %453 = vmatprep.subr.bf16.mxu0 0
    %454 = vmatpush1.bf16.xpose.msra.mxu0 0
    %455 = vmatprep.subr.bf16.mxu0 0
    %456 = vmatpush1.bf16.xpose.msra.mxu0 0
    %457 = vmatprep.subr.bf16.mxu0 0
    %458 = vmatpush1.bf16.xpose.msra.mxu0 0
    %459 = vmatprep.subr.bf16.mxu0 0
    %460 = vmatpush1.bf16.xpose.msra.mxu0 0
    %461 = vmatprep.subr.bf16.mxu0 0
    %462 = vmatpush1.bf16.xpose.msra.mxu0 0
    %463 = vmatprep.subr.bf16.mxu0 0
    %464 = vmatpush1.bf16.xpose.msra.mxu0 0
    %465 = vmatprep.subr.bf16.mxu0 0
    %466 = vmatpush1.bf16.xpose.msra.mxu0 0
    %467 = vmatprep.subr.bf16.mxu0 0
    %468 = vmatpush1.bf16.xpose.msra.mxu0 0
    %469 = vmatprep.subr.bf16.mxu0 0
    %470 = vmatpush1.bf16.xpose.msra.mxu0 0
    %471 = vmatprep.subr.bf16.mxu0 0
    %472 = vmatpush1.bf16.xpose.msra.mxu0 0
    %473 = vmatprep.subr.bf16.mxu0 0
    %474 = vmatpush1.bf16.xpose.msra.mxu0 0
    %475 = vmatprep.mubr.bf16.mxu0 0
    %476 = vmatmul.mubr.bf16.gmra.mrb[0].mxu0 %v441
    %v477 = vpop.f32.mrb[0].mxu0
    %v478 = vadd.f32 0.0, %v477
    %v479 = vpop.f32.mrb[0].mxu0
    %v480 = vpop.f32.mrb[0].mxu0
    %v481 = vadd.f32 0.0, %v480
    %v482 = vpop.f32.mrb[0].mxu0
    %483 = vdwg.mxu0
    %v484 = vsel %vm370, %v478, -inf
    %485 = vmax.xlane.f32.xlu0 %v484
    %v486 = vpop.xlane.xlu0 %485
    %v487 = vsel %vm370, %v481, -inf
    %488 = vmax.xlane.f32.xlu0 %v487
    %v489 = vpop.xlane.xlu0 %488
    %v490 = vsub.f32 %v478, %v486
    %v491 = vsub.f32 %v481, %v489
    %v492 = vmul.f32 %v490, 1.442695
    %v493 = vpow.pop %v492
    %v494 = vmul.f32 %v491, 1.442695
    %v495 = vpow.pop %v494
    %v496 = vsel %vm370, %v493, 0.0
    %497 = vadd.xlane.f32.xlu0 %v496
    %v498 = vpop.xlane.xlu0 %497
    %v499 = vsel %vm370, %v495, 0.0
    %500 = vadd.xlane.f32.xlu0 %v499
    %v501 = vpop.xlane.xlu0 %500
    %v502 = vpack.c.bf16 %v495, %v493
    %v503 = vpack.c.bf16 %v325, %v323
    %v505 = vsel %vm370, %v502, 0
    %507 = vmatprep.subr.bf16.mxu0 0
    %508 = vmatpush1.bf16.msra.mxu0 %v503
    %509 = vmatprep.subr.bf16.mxu0 0
    %510 = vmatpush1.bf16.msra.mxu0 0
    %511 = vmatprep.subr.bf16.mxu0 0
    %512 = vmatpush1.bf16.msra.mxu0 0
    %513 = vmatprep.subr.bf16.mxu0 0
    %514 = vmatpush1.bf16.msra.mxu0 0
    %515 = vmatprep.subr.bf16.mxu0 0
    %516 = vmatpush1.bf16.msra.mxu0 0
    %517 = vmatprep.subr.bf16.mxu0 0
    %518 = vmatpush1.bf16.msra.mxu0 0
    %519 = vmatprep.subr.bf16.mxu0 0
    %520 = vmatpush1.bf16.msra.mxu0 0
    %521 = vmatprep.subr.bf16.mxu0 0
    %522 = vmatpush1.bf16.msra.mxu0 0
    %523 = vmatprep.subr.bf16.mxu0 0
    %524 = vmatpush1.bf16.msra.mxu0 0
    %525 = vmatprep.subr.bf16.mxu0 0
    %526 = vmatpush1.bf16.msra.mxu0 0
    %527 = vmatprep.subr.bf16.mxu0 0
    %528 = vmatpush1.bf16.msra.mxu0 0
    %529 = vmatprep.subr.bf16.mxu0 0
    %530 = vmatpush1.bf16.msra.mxu0 0
    %531 = vmatprep.subr.bf16.mxu0 0
    %532 = vmatpush1.bf16.msra.mxu0 0
    %533 = vmatprep.subr.bf16.mxu0 0
    %534 = vmatpush1.bf16.msra.mxu0 0
    %535 = vmatprep.subr.bf16.mxu0 0
    %536 = vmatpush1.bf16.msra.mxu0 0
    %537 = vmatprep.subr.bf16.mxu0 0
    %538 = vmatpush1.bf16.msra.mxu0 0
    %539 = vmatprep.mubr.bf16.mxu0 0
    %540 = vmatmul.mubr.bf16.gmra.mrb[0].mxu0 %v505
    %v541 = vpop.f32.mrb[0].mxu0
    %v542 = vadd.f32 0.0, %v541
    %v543 = vpop.f32.mrb[0].mxu0
    %v544 = vpop.f32.mrb[0].mxu0
    %v545 = vadd.f32 0.0, %v544
    %v546 = vpop.f32.mrb[0].mxu0
    %547 = vdwg.mxu0
    %v548 = vrcp.pop %v498
    %v549 = vrcp.pop %v501
    %v550 = vmul.f32 %v542, %v548
    %v551 = vmul.f32 %v545, %v549
    %552 = vst [vmem:[#allocation10 + $0x10] sm:$0xff] %v550
    %553 = vst [vmem:[#allocation10 + $0x18] sm:$0xff] %v551
    // Predicated region
    $region34: #{tpu_custom_call.1} parent=1 // pred_check
      _
    $region35: #{tpu_custom_call.1} parent=1 // pred_check_branch
      %555 = sbr.rel (0) target = $region37
    $region36: #{tpu_custom_call.1} parent=1 // pred_region
      %s557 = ssub.s32 512, 512
      %558 = vsyncadd [#allocation4], %s557
      %s559 = sshll.u32 [#allocation10], 4
      %s560 = int_to_ptr.vmem [resolvable:$true] %s559
      %565 = dma.vmem_to_hbm [thread:$0]  %s560, 512, %s4, [#allocation4], 128, 128, 8
    $region37: #{tpu_custom_call.1} parent=1 // pred_fallthru
      _
    // Predicated region
    $region38: #{tpu_custom_call.1} parent=1 // pred_check
      _
    $region39: #{tpu_custom_call.1} parent=1 // pred_check_branch
      %567 = sbr.rel (0) target = $region41
    $region40: #{tpu_custom_call.1} parent=1 // pred_region
      %568 = dma.done [#allocation4], 512
    $region41: #{tpu_custom_call.1} parent=1 // pred_fallthru
      _
    %569 = vsyncpa [#allocation3], 1
    %570 = vsyncpa [#allocation6], 1
    %571 = vsyncpa [#allocation9], 1
    %572 = vsyncpa [#allocation4], 1

</llo_original>
